<compile_context>
chip_gen: v7x
topology: tpu7x:2x2x1
jax: 0.10.0
libtpu: 0.0.40
codegen_flags: <defaults>
</compile_context>

<pallas_src>
import functools

import jax
import jax.numpy as jnp
from jax.experimental import pallas as pl
from jax.experimental.pallas import tpu as pltpu


_IGNORE_INDEX = -100
_MIN_SLAB_BYTES = 4 * 1024 * 1024        # target per-buffer DMA slab when C is small
_ABS_MAX_TILE_ROWS = 32768
_DEFAULT_VMEM_CAPACITY = 128 * 1024 * 1024


def _round_up(x, m):
    return ((x + m - 1) // m) * m


def _vmem_capacity_bytes():
    """Physical VMEM per core (generation-aware), with a conservative fallback."""
    try:
        info = pltpu.get_tpu_info()
        for attr in ("vmem_capacity_bytes", "vmem_bytes"):
            cap = getattr(info, attr, None)
            if cap:
                return int(cap)
    except Exception:
        pass
    return _DEFAULT_VMEM_CAPACITY


def _pick_tile_rows(n_rows, n_classes, itemsize, vmem_budget):
    """Largest aligned row tile whose *real* working set fits the VMEM budget."""
    # Sublane alignment for the packed input layout: 8 (f32), 16 (bf16), 32 (int8/fp8).
    align = 8 * max(1, 4 // max(itemsize, 1))
    if n_rows <= align:
        return n_rows                                # full-extent block is always legal

    # Per-row VMEM cost: double-buffered logits+labels input slabs PLUS the in-kernel
    # f32/i32 temporaries (shifted logits, exp, one-hot iota/select) and misc.
    bytes_per_row = 2 * (n_classes * itemsize + 4) + 3 * n_classes * 4 + 16
    tile = vmem_budget // max(bytes_per_row, 1)

    # Cap scales with C: keep at least ~_MIN_SLAB_BYTES per input buffer when C is
    # small (amortizes the ~0.35 us per-step overhead) instead of a fixed row cap.
    max_rows = min(_ABS_MAX_TILE_ROWS,
                   max(2048, _MIN_SLAB_BYTES // max(n_classes * itemsize, 1)))
    tile = min(tile, max_rows)

    # Guarantee >= 2 grid steps so the "parallel" axis can split across v7x's two
    # TensorCores (harmless on 1-TC v5e/v6e).
    tile = min(tile, _round_up(pl.cdiv(n_rows, 2), align))

    return max(align, (tile // align) * align)


def _ce_kernel(logits_ref, labels_ref, sum_ref, cnt_ref, *,
               ignore_index, n_rows, tile_rows):
    """One (tile_rows, C) slab -> per-tile (sum of NLL, count of valid rows)."""
    x = logits_ref[...]                                     # (TM, C), input dtype
    lbl = labels_ref[...]                                   # (TM, 1), int32

    # Row max in the input dtype (exact; packed bf16 VALU on v6e/v7x).
    m = jnp.max(x, axis=-1, keepdims=True)                  # (TM, 1)

    # Shifted logits in f32 -- the only full-width f32 temporary.
    xm = x.astype(jnp.float32) - m.astype(jnp.float32)      # (TM, C)

    # exp-sum and one-hot pick of the label logit, both from xm (the max cancels:
    # nll = lse - x[label] = log(sum exp(x-m)) - (x[label] - m)).
    se = jnp.sum(jnp.exp(xm), axis=-1, keepdims=True)       # (TM, 1)
    col = jax.lax.broadcasted_iota(jnp.int32, xm.shape, 1)
    picked = jnp.sum(jnp.where(col == lbl, xm, 0.0),
                     axis=-1, keepdims=True)                # (TM, 1)
    nll = jnp.log(se) - picked                              # (TM, 1)

    # Mask ignored labels AND the padded rows of a partial last tile (in-kernel
    # reduction must not see garbage rows).
    row = (pl.program_id(0) * tile_rows
           + jax.lax.broadcasted_iota(jnp.int32, (tile_rows, 1), 0))
    valid = (lbl != ignore_index) & (row < n_rows)

    tile_sum = jnp.sum(jnp.where(valid, nll, 0.0), axis=0, keepdims=True)   # (1, 1)
    tile_cnt = jnp.sum(valid.astype(jnp.float32), axis=0, keepdims=True)    # (1, 1)

    # Lane-dense (8, 128) writeback of the two per-tile scalars (unmasked full vst).
    sum_ref[...] = jnp.broadcast_to(tile_sum.reshape(1, 1, 1), sum_ref.shape)
    cnt_ref[...] = jnp.broadcast_to(tile_cnt.reshape(1, 1, 1), cnt_ref.shape)


def cross_entropy_loss(logits, labels, *, ignore_index=_IGNORE_INDEX):
    """logits: (B, T, C) float; labels: (B, T) int. Returns scalar mean CE loss (f32)."""
    B, T, C = logits.shape
    N = B * T

    x = logits.reshape(N, C)                    # keep the HBM dtype (bf16 stays bf16)
    y = labels.reshape(N, 1).astype(jnp.int32)

    vmem_cap = _vmem_capacity_bytes()
    vmem_budget = (vmem_cap * 3) // 8           # ~24 MiB on v7x, ~48 MiB on v5e/v6e
    vmem_limit = vmem_cap // 2                  # headroom over the budget

    tile_rows = _pick_tile_rows(N, C, x.dtype.itemsize, vmem_budget)
    num_tiles = pl.cdiv(N, tile_rows)

    kernel = functools.partial(_ce_kernel, ignore_index=ignore_index,
                               n_rows=N, tile_rows=tile_rows)

    sums, cnts = pl.pallas_call(
        kernel,
        out_shape=(jax.ShapeDtypeStruct((num_tiles, 8, 128), jnp.float32),
                   jax.ShapeDtypeStruct((num_tiles, 8, 128), jnp.float32)),
        grid_spec=pltpu.PrefetchScalarGridSpec(
            num_scalar_prefetch=0,
            grid=(num_tiles,),
            in_specs=[
                pl.BlockSpec((tile_rows, C), lambda i: (i, 0)),
                pl.BlockSpec((tile_rows, 1), lambda i: (i, 0)),
            ],
            out_specs=[
                pl.BlockSpec((1, 8, 128), lambda i: (i, 0, 0)),
                pl.BlockSpec((1, 8, 128), lambda i: (i, 0, 0)),
            ],
        ),
        compiler_params=pltpu.CompilerParams(
            dimension_semantics=("parallel",),
            vmem_limit_bytes=vmem_limit,
        ),
    )(x, y)

    # Tiny final reduction over num_tiles scalars (torch reduction='mean').
    return jnp.sum(sums[:, 0, 0]) / jnp.sum(cnts[:, 0, 0])


if __name__ == "__main__":
    key = jax.random.PRNGKey(0)
    k1, k2 = jax.random.split(key)

    # batch=2, seq=8, num_classes=32  (torch sees logits.permute(0,2,1): (B,C,T))
    B, T, C = 2, 8, 32
    logits = jax.random.normal(k1, (B, T, C), dtype=jnp.float32)
    labels = jax.random.randint(k2, (B, T), 0, C, dtype=jnp.int32)

    loss = jax.block_until_ready(cross_entropy_loss(logits, labels))
    logp = jax.nn.log_softmax(logits, axis=-1)
    ref = -jnp.mean(jnp.take_along_axis(logp, labels[..., None], axis=-1))
    assert jnp.allclose(loss, ref, atol=1e-5), (loss, ref)

    # remainder path: N = B*T not a multiple of the row tile / sublane
    B2, T2 = 3, 7
    logits2 = jax.random.normal(k1, (B2, T2, C), dtype=jnp.float32)
    labels2 = jax.random.randint(k2, (B2, T2), 0, C, dtype=jnp.int32)
    loss2 = jax.block_until_ready(cross_entropy_loss(logits2, labels2))
    logp2 = jax.nn.log_softmax(logits2, axis=-1)
    ref2 = -jnp.mean(jnp.take_along_axis(logp2, labels2[..., None], axis=-1))
    assert jnp.allclose(loss2, ref2, atol=1e-5), (loss2, ref2)

    # ignore_index (-100), torch default semantics
    labels3 = labels.at[0, 0].set(-100)
    loss3 = jax.block_until_ready(cross_entropy_loss(logits, labels3))
    nll_ref = -jnp.take_along_axis(logp, labels[..., None], axis=-1)[..., 0]
    mask = labels3 != -100
    ref3 = jnp.sum(jnp.where(mask, nll_ref, 0.0)) / jnp.sum(mask)
    assert jnp.allclose(loss3, ref3, atol=1e-5), (loss3, ref3)

    # bf16 logits stay bf16 in HBM; f32 math stays on-chip
    logits_bf = logits.astype(jnp.bfloat16)
    loss_bf = jax.block_until_ready(cross_entropy_loss(logits_bf, labels))
    logp_bf = jax.nn.log_softmax(logits_bf.astype(jnp.float32), axis=-1)
    ref_bf = -jnp.mean(jnp.take_along_axis(logp_bf, labels[..., None], axis=-1))
    assert jnp.allclose(loss_bf, ref_bf, atol=1e-3), (loss_bf, ref_bf)

    print("KERNEL_OK")
</pallas_src>

<mosaic_0001>
module attributes {stable_mosaic.version = 11 : i64} {
  func.func @_ce_kernel(%arg0: i32, %arg1: memref<8x32xf32, #tpu.memory_space<vmem>>, %arg2: memref<8x1xi32, #tpu.memory_space<vmem>>, %arg3: memref<1x8x128xf32, #tpu.memory_space<vmem>>, %arg4: memref<1x8x128xf32, #tpu.memory_space<vmem>>) attributes {dimension_semantics = [#tpu.dimension_semantics<parallel>], iteration_bounds = array<i64: 2>, scalar_prefetch = 0 : i64, scratch_operands = 0 : i64, tpu.core_type = #tpu.core_type<tc>, window_params = [{transform_indices = @transform_0, window_bounds = array<i64: 8, 32>}, {transform_indices = @transform_1, window_bounds = array<i64: 8, 1>}, {transform_indices = @transform_2, window_bounds = array<i64: 1, 8, 128>}, {transform_indices = @transform_3, window_bounds = array<i64: 1, 8, 128>}]} {
    %c0 = arith.constant 0 : index
    %c0_0 = arith.constant 0 : index
    %0 = vector.load %arg1[%c0, %c0_0] : memref<8x32xf32, #tpu.memory_space<vmem>>, vector<8x32xf32>
    %c0_1 = arith.constant 0 : index
    %c0_2 = arith.constant 0 : index
    %1 = vector.load %arg2[%c0_1, %c0_2] : memref<8x1xi32, #tpu.memory_space<vmem>>, vector<8x1xi32>
    %cst = arith.constant dense<0xFF800000> : vector<8xf32>
    %2 = vector.multi_reduction <maximumf>, %0, %cst [1] : vector<8x32xf32> to vector<8xf32>
    %3 = vector.shape_cast %2 : vector<8xf32> to vector<8x1xf32>
    %4 = vector.broadcast %3 : vector<8x1xf32> to vector<8x32xf32>
    %5 = arith.subf %0, %4 : vector<8x32xf32>
    %6 = math.exp %5 : vector<8x32xf32>
    %cst_3 = arith.constant dense<0.000000e+00> : vector<8xf32>
    %7 = vector.multi_reduction <add>, %6, %cst_3 [1] : vector<8x32xf32> to vector<8xf32>
    %8 = vector.shape_cast %7 : vector<8xf32> to vector<8x1xf32>
    %9 = tpu.iota {dimensions = array<i32: 1>} : vector<8x32xi32>
    %10 = vector.broadcast %1 : vector<8x1xi32> to vector<8x32xi32>
    %11 = arith.cmpi eq, %9, %10 : vector<8x32xi32>
    %cst_4 = arith.constant 0.000000e+00 : f32
    %12 = vector.broadcast %cst_4 : f32 to vector<8x32xf32>
    %13 = arith.select %11, %5, %12 : vector<8x32xi1>, vector<8x32xf32>
    %cst_5 = arith.constant dense<0.000000e+00> : vector<8xf32>
    %14 = vector.multi_reduction <add>, %13, %cst_5 [1] : vector<8x32xf32> to vector<8xf32>
    %15 = vector.shape_cast %14 : vector<8xf32> to vector<8x1xf32>
    %16 = math.log %8 : vector<8x1xf32>
    %17 = arith.subf %16, %15 : vector<8x1xf32>
    %c8_i32 = arith.constant 8 : i32
    %18 = arith.muli %arg0, %c8_i32 : i32
    %19 = tpu.iota {dimensions = array<i32: 0>} : vector<8x1xi32>
    %20 = vector.broadcast %18 : i32 to vector<8x1xi32>
    %21 = arith.addi %20, %19 : vector<8x1xi32>
    %c-100_i32 = arith.constant -100 : i32
    %22 = vector.broadcast %c-100_i32 : i32 to vector<8x1xi32>
    %23 = arith.cmpi ne, %1, %22 : vector<8x1xi32>
    %c16_i32 = arith.constant 16 : i32
    %24 = vector.broadcast %c16_i32 : i32 to vector<8x1xi32>
    %25 = arith.cmpi slt, %21, %24 : vector<8x1xi32>
    %26 = arith.andi %23, %25 : vector<8x1xi1>
    %cst_6 = arith.constant 0.000000e+00 : f32
    %27 = vector.broadcast %cst_6 : f32 to vector<8x1xf32>
    %28 = arith.select %26, %17, %27 : vector<8x1xi1>, vector<8x1xf32>
    %cst_7 = arith.constant dense<0.000000e+00> : vector<1xf32>
    %29 = vector.multi_reduction <add>, %28, %cst_7 [0] : vector<8x1xf32> to vector<1xf32>
    %30 = vector.shape_cast %29 : vector<1xf32> to vector<1x1xf32>
    %31 = arith.extui %26 : vector<8x1xi1> to vector<8x1xi32>
    %32 = arith.sitofp %31 : vector<8x1xi32> to vector<8x1xf32>
    %cst_8 = arith.constant dense<0.000000e+00> : vector<1xf32>
    %33 = vector.multi_reduction <add>, %32, %cst_8 [0] : vector<8x1xf32> to vector<1xf32>
    %34 = vector.shape_cast %33 : vector<1xf32> to vector<1x1xf32>
    %35 = vector.shape_cast %30 : vector<1x1xf32> to vector<1x1x1xf32>
    %36 = vector.shape_cast %35 : vector<1x1x1xf32> to vector<1x1x1xf32>
    %37 = vector.broadcast %36 : vector<1x1x1xf32> to vector<1x8x128xf32>
    %c0_9 = arith.constant 0 : index
    %c0_10 = arith.constant 0 : index
    %c0_11 = arith.constant 0 : index
    %38 = vector.load %arg3[%c0_9, %c0_10, %c0_11] : memref<1x8x128xf32, #tpu.memory_space<vmem>>, vector<1x8x128xf32>
    tpu.vector_store %arg3[%c0_9, %c0_10, %c0_11], %37 {strides = array<i32>} : memref<1x8x128xf32, #tpu.memory_space<vmem>>, vector<1x8x128xf32>,
    %39 = vector.shape_cast %34 : vector<1x1xf32> to vector<1x1x1xf32>
    %40 = vector.shape_cast %39 : vector<1x1x1xf32> to vector<1x1x1xf32>
    %41 = vector.broadcast %40 : vector<1x1x1xf32> to vector<1x8x128xf32>
    %c0_12 = arith.constant 0 : index
    %c0_13 = arith.constant 0 : index
    %c0_14 = arith.constant 0 : index
    %42 = vector.load %arg4[%c0_12, %c0_13, %c0_14] : memref<1x8x128xf32, #tpu.memory_space<vmem>>, vector<1x8x128xf32>
    tpu.vector_store %arg4[%c0_12, %c0_13, %c0_14], %41 {strides = array<i32>} : memref<1x8x128xf32, #tpu.memory_space<vmem>>, vector<1x8x128xf32>,
    return
  }
  func.func @transform_0(%arg0: i32) -> (i32, i32) {
    %c0_i32 = arith.constant 0 : i32
    %c0_i32_0 = arith.constant 0 : i32
    return %arg0, %c0_i32 : i32, i32
  }
  func.func @transform_1(%arg0: i32) -> (i32, i32) {
    %c0_i32 = arith.constant 0 : i32
    %c0_i32_0 = arith.constant 0 : i32
    return %arg0, %c0_i32 : i32, i32
  }
  func.func @transform_2(%arg0: i32) -> (i32, i32, i32) {
    %c0_i32 = arith.constant 0 : i32
    %c0_i32_0 = arith.constant 0 : i32
    %c0_i32_1 = arith.constant 0 : i32
    return %arg0, %c0_i32, %c0_i32_0 : i32, i32, i32
  }
  func.func @transform_3(%arg0: i32) -> (i32, i32, i32) {
    %c0_i32 = arith.constant 0 : i32
    %c0_i32_0 = arith.constant 0 : i32
    %c0_i32_1 = arith.constant 0 : i32
    return %arg0, %c0_i32, %c0_i32_0 : i32, i32, i32
  }
}

</mosaic_0001>

<llo_original>
// kernel: tpu_custom_call.1
$region0: #{tpu_custom_call.1}
  #allocation0 [shape = 'u32[]', space=smem, size = 0x4, offset = 0x4, fixed_abs, tag = 'smem constant byte address 0x4 - core index']
  #allocation1 [shape = 'u32[144,128]{1,0:T(1,128)}', space=vmem, size = 0x12000, scoped, tag = 'internal scratch']
  %s0 = inlined_call_operand.hbm [shape: f32[16,32], index: 0, kind: input, shape index: {}]
  %s1 = inlined_call_operand.hbm [shape: s32[16,1], index: 1, kind: input, shape index: {}]
  %s2 = inlined_call_operand.hbm [shape: f32[2,8,128], index: 2, kind: output, shape index: {0}]
  %s3 = inlined_call_operand.hbm [shape: f32[2,8,128], index: 3, kind: output, shape index: {1}]
  %4 = xla_tuple %s2, %s3
  %s5 = sld [smem:[#allocation0]]
  $region57: #{tpu_custom_call.1} parent=0
    _
  %s7 = ssub.s32 1, %s5
  %s8 = scalar_select 0, %s7, %s5
  $region1: #{tpu_custom_call.1} parent=0
    #allocation2 [shape = 'u8[8192]{0}', space=vmem, size = 0x2000, scoped, tag = 'input window, operand 0']
    #allocation3 [shape = 's32[2]{0}', space=sflag, size = 0x8, scoped, tag = 'scoped memory for tpu_custom_call.1']
    #allocation4 [shape = 's32[2]{0}', space=sflag, size = 0x8, scoped, tag = 'scoped memory for tpu_custom_call.1']
    #allocation5 [shape = 'u8[8192]{0}', space=vmem, size = 0x2000, scoped, tag = 'input window, operand 1']
    #allocation6 [shape = 's32[2]{0}', space=sflag, size = 0x8, scoped, tag = 'scoped memory for tpu_custom_call.1']
    #allocation7 [shape = 'u8[8192]{0}', space=vmem, size = 0x2000, scoped, tag = 'output window, operand 0']
    #allocation8 [shape = 'u8[8192]{0}', space=vmem, size = 0x2000, scoped, tag = 'output window, operand 1']
    #allocation9 [shape = 's32[2]{0}', space=sflag, size = 0x8, scoped, tag = 'scoped memory for tpu_custom_call.1']
    %9 = vsyncpa [#allocation3], 0
    %s10 = scalar_lea.sflag [#allocation3], 1
    %11 = vsyncpa %s10, 0
    %12 = vsyncpa [#allocation6], 0
    %s13 = scalar_lea.sflag [#allocation6], 1
    %14 = vsyncpa %s13, 0
    %15 = vsyncpa [#allocation4], 0
    %s16 = scalar_lea.sflag [#allocation4], 1
    %17 = vsyncpa %s16, 0
    %18 = vsyncpa [#allocation9], 0
    %s19 = scalar_lea.sflag [#allocation9], 1
    %20 = vsyncpa %s19, 0
    loop: start=0, step=1, limit=4
    $region2: #{tpu_custom_call.1} parent=1 // loop_pre_header
      _
    $region3: #{tpu_custom_call.1} parent=1 // loop_header
      %s22 = sphi 0, %s26
      %p23 = scmp.ge.s32.totalorder %s22, 4
      %s32 = sphi 0, %s34
      %s35 = sphi 0, %s32
      %s36 = sphi 0, %s35
      %s52 = sphi 0, %s36
      %s58 = sphi 0, %s60
      %s61 = sphi 0, %s58
      %s62 = sphi 0, %s61
      %s78 = sphi 0, %s62
      %s84 = sphi 0, %s86
      %s87 = sphi 0, %s84
      %s88 = sphi 0, %s87
      %s104 = sphi 0, %s88
      %s110 = sphi 0, %s112
      %s113 = sphi 0, %s110
      %s114 = sphi 0, %s113
      %s130 = sphi 0, %s114
    $region4: #{tpu_custom_call.1} parent=1 // loop_header_branch
      %25 = sbr.rel (%p23) target = $region8
    $region5: #{tpu_custom_call.1} parent=1 // loop_body
      %s27 = ssub.s32 %s22, 1
      %s28 = ssub.s32 %s22, 2
      %s29 = sadd.s32 %s22, 1
      %s30 = ssub.s32 %s22, %s29
      %p31 = scmp.eq.s32.totalorder %s30, 0
      %s33 = sadd.s32 %s32, 1
      %s34 = scalar_select %p31, %s32, %s33
      %p37 = pneg %p31
      %p38 = scmp.eq.s32.totalorder %s22, 1
      %p39 = por %p37, %p38
      %p40 = scmp.ne.s32.totalorder %s32, %s35
      %p41 = scmp.eq.s32.totalorder %s22, 0
      %p42 = por %p40, %p41
      %p43 = scmp.ne.s32.totalorder %s32, %s35
      %p44 = scmp.eq.s32.totalorder %s27, 1
      %p45 = por %p43, %p44
      %p46 = scmp.ne.s32.totalorder %s35, %s36
      %p47 = scmp.eq.s32.totalorder %s27, 0
      %p48 = por %p46, %p47
      %p49 = scmp.ne.s32.totalorder %s35, %s36
      %p50 = scmp.eq.s32.totalorder %s28, 1
      %p51 = por %p49, %p50
      %p53 = scmp.ne.s32.totalorder %s36, %s52
      %p54 = scmp.eq.s32.totalorder %s28, 0
      %p55 = por %p53, %p54
      %s56 = ssub.s32 %s22, %s29
      %p57 = scmp.eq.s32.totalorder %s56, 0
      %s59 = sadd.s32 %s58, 1
      %s60 = scalar_select %p57, %s58, %s59
      %p63 = pneg %p57
      %p64 = scmp.eq.s32.totalorder %s22, 1
      %p65 = por %p63, %p64
      %p66 = scmp.ne.s32.totalorder %s58, %s61
      %p67 = scmp.eq.s32.totalorder %s22, 0
      %p68 = por %p66, %p67
      %p69 = scmp.ne.s32.totalorder %s58, %s61
      %p70 = scmp.eq.s32.totalorder %s27, 1
      %p71 = por %p69, %p70
      %p72 = scmp.ne.s32.totalorder %s61, %s62
      %p73 = scmp.eq.s32.totalorder %s27, 0
      %p74 = por %p72, %p73
      %p75 = scmp.ne.s32.totalorder %s61, %s62
      %p76 = scmp.eq.s32.totalorder %s28, 1
      %p77 = por %p75, %p76
      %p79 = scmp.ne.s32.totalorder %s62, %s78
      %p80 = scmp.eq.s32.totalorder %s28, 0
      %p81 = por %p79, %p80
      %s82 = ssub.s32 %s22, %s29
      %p83 = scmp.eq.s32.totalorder %s82, 0
      %s85 = sadd.s32 %s84, 1
      %s86 = scalar_select %p83, %s84, %s85
      %p89 = pneg %p83
      %p90 = scmp.eq.s32.totalorder %s22, 1
      %p91 = por %p89, %p90
      %p92 = scmp.ne.s32.totalorder %s84, %s87
      %p93 = scmp.eq.s32.totalorder %s22, 0
      %p94 = por %p92, %p93
      %p95 = scmp.ne.s32.totalorder %s84, %s87
      %p96 = scmp.eq.s32.totalorder %s27, 1
      %p97 = por %p95, %p96
      %p98 = scmp.ne.s32.totalorder %s87, %s88
      %p99 = scmp.eq.s32.totalorder %s27, 0
      %p100 = por %p98, %p99
      %p101 = scmp.ne.s32.totalorder %s87, %s88
      %p102 = scmp.eq.s32.totalorder %s28, 1
      %p103 = por %p101, %p102
      %p105 = scmp.ne.s32.totalorder %s88, %s104
      %p106 = scmp.eq.s32.totalorder %s28, 0
      %p107 = por %p105, %p106
      %s108 = ssub.s32 %s22, %s29
      %p109 = scmp.eq.s32.totalorder %s108, 0
      %s111 = sadd.s32 %s110, 1
      %s112 = scalar_select %p109, %s110, %s111
      %p115 = pneg %p109
      %p116 = scmp.eq.s32.totalorder %s22, 1
      %p117 = por %p115, %p116
      %p118 = scmp.ne.s32.totalorder %s110, %s113
      %p119 = scmp.eq.s32.totalorder %s22, 0
      %p120 = por %p118, %p119
      %p121 = scmp.ne.s32.totalorder %s110, %s113
      %p122 = scmp.eq.s32.totalorder %s27, 1
      %p123 = por %p121, %p122
      %p124 = scmp.ne.s32.totalorder %s113, %s114
      %p125 = scmp.eq.s32.totalorder %s27, 0
      %p126 = por %p124, %p125
      %p127 = scmp.ne.s32.totalorder %s113, %s114
      %p128 = scmp.eq.s32.totalorder %s28, 1
      %p129 = por %p127, %p128
      %p131 = scmp.ne.s32.totalorder %s114, %s130
      %p132 = scmp.eq.s32.totalorder %s28, 0
      %p133 = por %p131, %p132
      %p134 = scmp.le.s32.totalorder 1, %s22
      %p135 = scmp.lt.s32.totalorder %s22, 3
      %p136 = pnand %p134, %p135
      %p137 = pneg %p136
      // Predicated region
      $region9: #{tpu_custom_call.1} parent=5 // pred_check
        _
      $region10: #{tpu_custom_call.1} parent=5 // pred_check_branch
        %139 = sbr.rel (%p136) target = $region12
      $region11: #{tpu_custom_call.1} parent=5 // pred_region
        %s140 = ssub.s32 %s22, 1
      $region12: #{tpu_custom_call.1} parent=5 // pred_fallthru
        _
      %p141 = scmp.lt.s32.totalorder %s22, 2
      // Predicated region
      $region13: #{tpu_custom_call.1} parent=5 // pred_check
        %p142 = pneg %p141
      $region14: #{tpu_custom_call.1} parent=5 // pred_check_branch
        %144 = sbr.rel (%p142) target = $region16
      $region15: #{tpu_custom_call.1} parent=5 // pred_region
        // Predicated region
        $region17: #{tpu_custom_call.1} parent=15 // pred_check
          %p145 = pneg %p42
        $region18: #{tpu_custom_call.1} parent=15 // pred_check_branch
          %147 = sbr.rel (%p145) target = $region20
        $region19: #{tpu_custom_call.1} parent=15 // pred_region
          %s148 = sand.u32 %s32, 1
          %s149 = scalar_lea.sflag [#allocation3], %s148
          %s150 = sand.u32 %s32, 1
          %s151 = smul.addr %s150, 8
          %s152 = scalar_lea.vmem [#allocation2], %s151
          %s154 = ssub.s32 128, 128
          %155 = vsyncadd %s149, %s154
          %s156 = smul.addr %s22, 128
          %s157 = scalar_lea.hbm %s0, %s156
          %s159 = sshll.u32 %s152, 4
          %s160 = int_to_ptr.vmem [resolvable:$true] %s159
          %162 = dma.hbm_to_vmem [thread:$0]  %s157, 128, %s160, %s149
        $region20: #{tpu_custom_call.1} parent=15 // pred_fallthru
          _
        // Predicated region
        $region21: #{tpu_custom_call.1} parent=15 // pred_check
          %p163 = pneg %p68
        $region22: #{tpu_custom_call.1} parent=15 // pred_check_branch
          %165 = sbr.rel (%p163) target = $region24
        $region23: #{tpu_custom_call.1} parent=15 // pred_region
          %s166 = sand.u32 %s58, 1
          %s167 = scalar_lea.sflag [#allocation6], %s166
          %s168 = sand.u32 %s58, 1
          %s169 = smul.addr %s168, 8
          %s170 = scalar_lea.vmem [#allocation5], %s169
          %s172 = ssub.s32 128, 128
          %173 = vsyncadd %s167, %s172
          %s174 = smul.addr %s22, 128
          %s175 = scalar_lea.hbm %s1, %s174
          %s177 = sshll.u32 %s170, 4
          %s178 = int_to_ptr.vmem [resolvable:$true] %s177
          %180 = dma.hbm_to_vmem [thread:$0]  %s175, 128, %s178, %s167
        $region24: #{tpu_custom_call.1} parent=15 // pred_fallthru
          _
      $region16: #{tpu_custom_call.1} parent=5 // pred_fallthru
        _
      %p181 = scmp.le.s32.totalorder 1, %s22
      %p182 = scmp.lt.s32.totalorder %s22, 3
      %p183 = pnand %p181, %p182
      %p184 = pneg %p183
      // Predicated region
      $region25: #{tpu_custom_call.1} parent=5 // pred_check
        _
      $region26: #{tpu_custom_call.1} parent=5 // pred_check_branch
        %186 = sbr.rel (%p183) target = $region28
      $region27: #{tpu_custom_call.1} parent=5 // pred_region
        %s187 = ssub.s32 %s22, 1
        %s188 = sand.u32 %s35, 1
        %s189 = scalar_lea.sflag [#allocation3], %s188
        %s190 = sand.u32 %s35, 1
        %s191 = smul.addr %s190, 8
        %s192 = scalar_lea.vmem [#allocation2], %s191
        // Predicated region
        $region29: #{tpu_custom_call.1} parent=27 // pred_check
          %p193 = pneg %p48
        $region30: #{tpu_custom_call.1} parent=27 // pred_check_branch
          %195 = sbr.rel (%p193) target = $region32
        $region31: #{tpu_custom_call.1} parent=27 // pred_region
          %196 = dma.done %s189, 128
        $region32: #{tpu_custom_call.1} parent=27 // pred_fallthru
          _
        %s197 = sand.u32 %s61, 1
        %s198 = scalar_lea.sflag [#allocation6], %s197
        %s199 = sand.u32 %s61, 1
        %s200 = smul.addr %s199, 8
        %s201 = scalar_lea.vmem [#allocation5], %s200
        // Predicated region
        $region33: #{tpu_custom_call.1} parent=27 // pred_check
          %p202 = pneg %p74
        $region34: #{tpu_custom_call.1} parent=27 // pred_check_branch
          %204 = sbr.rel (%p202) target = $region36
        $region35: #{tpu_custom_call.1} parent=27 // pred_region
          %205 = dma.done %s198, 128
        $region36: #{tpu_custom_call.1} parent=27 // pred_fallthru
          _
        %s206 = sand.u32 %s35, 1
        %s207 = scalar_lea.sflag [#allocation3], %s206
        %s208 = sand.u32 %s35, 1
        %s209 = smul.addr %s208, 8
        %s210 = scalar_lea.vmem [#allocation2], %s209
        %p211 = pneg %p48
        %p212 = pneg %p45
        %s213 = sand.u32 %s61, 1
        %s214 = scalar_lea.sflag [#allocation6], %s213
        %s215 = sand.u32 %s61, 1
        %s216 = smul.addr %s215, 8
        %s217 = scalar_lea.vmem [#allocation5], %s216
        %p218 = pneg %p74
        %p219 = pneg %p71
        %p220 = pneg %p100
        %p221 = pneg %p97
        %s222 = sand.u32 %s87, 1
        %s223 = scalar_lea.sflag [#allocation4], %s222
        %s224 = sand.u32 %s87, 1
        %s225 = smul.addr %s224, 8
        %s226 = scalar_lea.vmem [#allocation7], %s225
        %p227 = pneg %p126
        %p228 = pneg %p123
        %s229 = sand.u32 %s113, 1
        %s230 = scalar_lea.sflag [#allocation9], %s229
        %s231 = sand.u32 %s113, 1
        %s232 = smul.addr %s231, 8
        %s233 = scalar_lea.vmem [#allocation8], %s232
        %v234 = vld [vmem:[%s192] sm:$0xff]
        %v235 = vld [vmem:[%s201] sm:$0xff]
        %vm236 = vcmask 261120
        %v237 = vsel %vm236, %v234, -inf
        %238 = vmax.xlane.f32.xlu0 %v237
        %v239 = vpop.xlane.xlu0 %238
        %v240 = vsub.f32 %v234, %v239
        %v241 = vmul.f32 %v240, 1.442695
        %v242 = vpow.pop %v241
        %v243 = vsel %vm236, %v242, 0.0
        %244 = vadd.xlane.f32.xlu0 %v243
        %v245 = vpop.xlane.xlu0 %244
        %v246 = vlaneseq
        %v247 = vand.u32 %v246, 127
        %248 = vset.pattern.permute.xlu0 0
        %249 = vperm.xlu0 %248, %v235
        %v250 = vpop.permute.xlu0 %249
        %vm251 = vcmp.eq.s32.totalorder %v247, %v250
        %v252 = vsel %vm251, %v240, 0.0
        %v253 = vsel %vm236, %v252, 0.0
        %254 = vadd.xlane.f32.xlu0 %v253
        %v255 = vpop.xlane.xlu0 %254
        %v256 = vlog2.pop %v245
        %v257 = vmul.f32 %v256, 0.6931472
        %v258 = vsub.f32 %v257, %v255
        %s259 = smul.u32 %s27, 8
        %v260 = vlaneseq
        %v261 = vshrl.u32 %v260, 7
        %v262 = vstv %s259
        %v263 = vadd.s32 %v262, %v261
        %vm264 = vcmp.ne.s32.totalorder %v235, 4294967196
        %vm265 = vcmp.lt.s32.totalorder %v263, 16
        %vm266 = vmand %vm264, %vm265
        %v267 = vsel %vm266, %v258, 0.0
        %vm268 = vcmask 7168
        %v269 = vsel %vm268, %v267, 0.0
        %v270 = vrot.slane %v269, 4
        %v271 = vadd.f32 %v269, %v270
        %v272 = vrot.slane %v271, 2
        %v273 = vadd.f32 %v271, %v272
        %v274 = vrot.slane %v273, 1
        %v275 = vadd.f32 %v273, %v274
        %v276 = vsel %vm266, 1, 0
        %v277 = vcvt.s32.f32 %v276
        %v278 = vsel %vm268, %v277, 0.0
        %v279 = vrot.slane %v278, 4
        %v280 = vadd.f32 %v278, %v279
        %v281 = vrot.slane %v280, 2
        %v282 = vadd.f32 %v280, %v281
        %v283 = vrot.slane %v282, 1
        %v284 = vadd.f32 %v282, %v283
        %286 = vset.pattern.permute.xlu0 0
        %287 = vperm.xlu0 %286, %v275
        %v288 = vpop.permute.xlu0 %287
        %290 = vst [vmem:[%s226] sm:$0xff] %v288
        %292 = vset.pattern.permute.xlu0 0
        %293 = vperm.xlu0 %292, %v284
        %v294 = vpop.permute.xlu0 %293
        %296 = vst [vmem:[%s233] sm:$0xff] %v294
        %s297 = sand.u32 %s87, 1
        %s298 = scalar_lea.sflag [#allocation4], %s297
        %s299 = sand.u32 %s87, 1
        %s300 = smul.addr %s299, 8
        %s301 = scalar_lea.vmem [#allocation7], %s300
        %s302 = sand.u32 %s113, 1
        %s303 = scalar_lea.sflag [#allocation9], %s302
        %s304 = sand.u32 %s113, 1
        %s305 = smul.addr %s304, 8
        %s306 = scalar_lea.vmem [#allocation8], %s305
        // Predicated region
        $region37: #{tpu_custom_call.1} parent=27 // pred_check
          %p307 = pneg %p97
        $region38: #{tpu_custom_call.1} parent=27 // pred_check_branch
          %309 = sbr.rel (%p307) target = $region40
        $region39: #{tpu_custom_call.1} parent=27 // pred_region
          %s311 = ssub.s32 128, 128
          %312 = vsyncadd %s298, %s311
          %s313 = smul.addr %s27, 128
          %s314 = scalar_lea.hbm %s2, %s313
          %s316 = sshll.u32 %s301, 4
          %s317 = int_to_ptr.vmem [resolvable:$true] %s316
          %319 = dma.vmem_to_hbm [thread:$0]  %s317, 128, %s314, %s298
        $region40: #{tpu_custom_call.1} parent=27 // pred_fallthru
          _
        // Predicated region
        $region41: #{tpu_custom_call.1} parent=27 // pred_check
          %p320 = pneg %p123
        $region42: #{tpu_custom_call.1} parent=27 // pred_check_branch
          %322 = sbr.rel (%p320) target = $region44
        $region43: #{tpu_custom_call.1} parent=27 // pred_region
          %s324 = ssub.s32 128, 128
          %325 = vsyncadd %s303, %s324
          %s326 = smul.addr %s27, 128
          %s327 = scalar_lea.hbm %s3, %s326
          %s329 = sshll.u32 %s306, 4
          %s330 = int_to_ptr.vmem [resolvable:$true] %s329
          %332 = dma.vmem_to_hbm [thread:$0]  %s330, 128, %s327, %s303
        $region44: #{tpu_custom_call.1} parent=27 // pred_fallthru
          _
      $region28: #{tpu_custom_call.1} parent=5 // pred_fallthru
        _
      %p333 = scmp.le.s32.totalorder 2, %s22
      // Predicated region
      $region45: #{tpu_custom_call.1} parent=5 // pred_check
        %p334 = pneg %p333
      $region46: #{tpu_custom_call.1} parent=5 // pred_check_branch
        %336 = sbr.rel (%p334) target = $region48
      $region47: #{tpu_custom_call.1} parent=5 // pred_region
        %s337 = ssub.s32 %s22, 2
        // Predicated region
        $region49: #{tpu_custom_call.1} parent=47 // pred_check
          %p338 = pneg %p103
        $region50: #{tpu_custom_call.1} parent=47 // pred_check_branch
          %340 = sbr.rel (%p338) target = $region52
        $region51: #{tpu_custom_call.1} parent=47 // pred_region
          %s341 = sand.u32 %s88, 1
          %s342 = scalar_lea.sflag [#allocation4], %s341
          %s343 = sand.u32 %s88, 1
          %s344 = smul.addr %s343, 8
          %s345 = scalar_lea.vmem [#allocation7], %s344
          %346 = dma.done %s342, 128
        $region52: #{tpu_custom_call.1} parent=47 // pred_fallthru
          _
        // Predicated region
        $region53: #{tpu_custom_call.1} parent=47 // pred_check
          %p347 = pneg %p129
        $region54: #{tpu_custom_call.1} parent=47 // pred_check_branch
          %349 = sbr.rel (%p347) target = $region56
        $region55: #{tpu_custom_call.1} parent=47 // pred_region
          %s350 = sand.u32 %s114, 1
          %s351 = scalar_lea.sflag [#allocation9], %s350
          %s352 = sand.u32 %s114, 1
          %s353 = smul.addr %s352, 8
          %s354 = scalar_lea.vmem [#allocation8], %s353
          %355 = dma.done %s351, 128
        $region56: #{tpu_custom_call.1} parent=47 // pred_fallthru
          _
      $region48: #{tpu_custom_call.1} parent=5 // pred_fallthru
        _
    $region6: #{tpu_custom_call.1} parent=1 // loop_footer
      %s26 = sadd.s32 1, %s22
    $region7: #{tpu_custom_call.1} parent=1 // loop_footer_branch
      %21 = sbr.rel target = $region3
    $region8: #{tpu_custom_call.1} parent=1 // loop_exit
      _
    %356 = vsyncpa [#allocation3], 1
    %s357 = scalar_lea.sflag [#allocation3], 1
    %358 = vsyncpa %s357, 1
    %359 = vsyncpa [#allocation6], 1
    %s360 = scalar_lea.sflag [#allocation6], 1
    %361 = vsyncpa %s360, 1
    %362 = vsyncpa [#allocation4], 1
    %s363 = scalar_lea.sflag [#allocation4], 1
    %364 = vsyncpa %s363, 1
    %365 = vsyncpa [#allocation9], 1
    %s366 = scalar_lea.sflag [#allocation9], 1
    %367 = vsyncpa %s366, 1

</llo_original>
